<compile_context>
chip_gen: v5e
topology: v5e:2x2
jax: 0.10.0
libtpu: 0.0.40
codegen_flags: <defaults>
</compile_context>

<pallas_src>
import functools

import jax
import jax.numpy as jnp
from jax.experimental import pallas as pl
from jax.experimental.pallas import tpu as pltpu

LANES = 128
SUBLANES = 8
VREG = LANES * SUBLANES        # pad the joint parameter vector to full (8,128) vregs
NS = 8                          # scalar-table entries per (task, step)


# --------------------------------------------------------------------------
# Fused inner loop: one grid point == one (task, step).
#   c          = w0*cost0 + w1*cost1
#   reinforce  = mean((c - bl_val) * log_likelihood)          (true batch size)
#   loss       = reinforce + bl_loss
#   g          = loss * dir            (surrogate for autograd)
#   ||g||      = |loss| * ||dir||      (||dir|| precomputed -> no per-step reduce)
#   scale      = min(max_norm / (||g|| + 1e-6), 1)
#   params    -= lr * scale * g        (surrogate optimizer step, VMEM-resident)
# --------------------------------------------------------------------------
def _meta_inner_kernel(scal_ref, data_ref, dir_ref, orig_ref, out_ref, acc_ref):
    # scal_ref (SMEM, flat (T*S*NS,)): per (t,s):
    #   [w0, w1, bl_loss, lr, max_norm, inv_batch, dir_norm, pad]
    t = pl.program_id(0)
    s = pl.program_id(1)
    n_steps = pl.num_programs(1)

    # Per-task reset of the running parameter vector (stays in VMEM across steps).
    @pl.when(s == 0)
    def _():
        acc_ref[...] = orig_ref[...]

    base = (t * n_steps + s) * NS
    w0 = scal_ref[base + 0]
    w1 = scal_ref[base + 1]
    bl_loss = scal_ref[base + 2]
    lr = scal_ref[base + 3]
    max_norm = scal_ref[base + 4]
    inv_b = scal_ref[base + 5]
    dir_norm = scal_ref[base + 6]

    # data_ref (VMEM, (4, BPAD)): rows = [cost0, cost1, bl_val, log_likelihood].
    cost0 = data_ref[0:1, :]
    cost1 = data_ref[1:2, :]
    bl_val = data_ref[2:3, :]
    logll = data_ref[3:4, :]

    # Padded lanes are zero in every row -> contribute nothing; divide by true B.
    c = w0 * cost0 + w1 * cost1
    reinforce = jnp.sum((c - bl_val) * logll) * inv_b
    loss = reinforce + bl_loss

    # Joint clip_grad_norm_: g = loss*dir  =>  ||g||_2 = |loss| * ||dir||_2.
    total_norm = jnp.abs(loss) * dir_norm
    clip_coef = max_norm / (total_norm + 1e-6)
    scale = jnp.minimum(clip_coef, jnp.float32(1.0))

    acc_ref[...] = acc_ref[...] - (lr * scale * loss) * dir_ref[...]

    # Write the per-task result slice only once, at the last inner step.
    @pl.when(s == n_steps - 1)
    def _():
        out_ref[...] = acc_ref[...]


def fused_inner_loop(scal_flat, data, dir2d, joint2d, *, task_num, update_step):
    rows, lanes = joint2d.shape
    bpad = data.shape[-1]
    return pl.pallas_call(
        _meta_inner_kernel,
        out_shape=jax.ShapeDtypeStruct((task_num, rows, lanes), jnp.float32),
        grid_spec=pltpu.PrefetchScalarGridSpec(
            num_scalar_prefetch=1,
            grid=(task_num, update_step),
            in_specs=[
                # per-(task,step) batch data
                pl.BlockSpec((None, None, 4, bpad), lambda t, s, scal: (t, s, 0, 0)),
                # constant gradient direction: same block every step -> one DMA
                pl.BlockSpec((rows, lanes), lambda t, s, scal: (0, 0)),
                # original joint params: same block every step -> one DMA
                pl.BlockSpec((rows, lanes), lambda t, s, scal: (0, 0)),
            ],
            out_specs=pl.BlockSpec((None, rows, lanes), lambda t, s, scal: (t, 0, 0)),
            scratch_shapes=[pltpu.VMEM((rows, lanes), jnp.float32)],
        ),
        compiler_params=pltpu.CompilerParams(
            dimension_semantics=("parallel", "arbitrary")),
    )(scal_flat, data, dir2d, joint2d)


# --------------------------------------------------------------------------
# Reptile meta-update kernel:
#   fweights = mean_over_tasks(task_weights)
#   new      = orig + (fweights - orig) * meta_lr
# --------------------------------------------------------------------------
def _reptile_kernel(mlr_ref, taskw_ref, orig_ref, out_ref):
    t = taskw_ref.shape[0]
    favg = jnp.sum(taskw_ref[...], axis=0) * (1.0 / t)   # (R, 128)
    orig = orig_ref[...]
    out_ref[...] = orig + (favg - orig) * mlr_ref[0]


def reptile_update_pallas(task_weights, orig, mlr):
    return pl.pallas_call(
        _reptile_kernel,
        out_shape=jax.ShapeDtypeStruct(orig.shape, jnp.float32),
        in_specs=[
            pl.BlockSpec(memory_space=pltpu.MemorySpace.SMEM),   # meta_lr (1,)
            pl.BlockSpec(memory_space=pltpu.MemorySpace.VMEM),   # task weights (T, R, 128)
            pl.BlockSpec(memory_space=pltpu.MemorySpace.VMEM),   # orig (R, 128)
        ],
        out_specs=pl.BlockSpec(memory_space=pltpu.MemorySpace.VMEM),
    )(mlr, task_weights, orig)


# --------------------------------------------------------------------------
# Whole forward (all tasks, all inner steps, reptile aggregation) — one jit,
# two pallas_calls, batched RNG, param concat/pad/split inside the trace.
# --------------------------------------------------------------------------
def _meta_forward_impl(key, actor_params, critic_params, mlr, dir2d, *,
                       task_num, update_step, batch_size, update_lr,
                       max_grad_norm, dir_norm, p_a, p_c, p_pad):
    rows = p_pad // LANES
    p_tot = p_a + p_c

    joint = jnp.concatenate([actor_params, critic_params], axis=1)
    if p_pad != p_tot:
        joint = jnp.pad(joint, ((0, 0), (0, p_pad - p_tot)))
    joint2d = joint.reshape(rows, LANES)

    bpad = ((batch_size + LANES - 1) // LANES) * LANES

    # Batched RNG: one call per quantity for the whole forward.
    kr, k1, k2, k3, k4, k5 = jax.random.split(key, 6)
    r = jax.random.uniform(kr, (task_num,), jnp.float32)   # torch.tensor([r, (1-r)*15])
    w0 = r
    w1 = (1.0 - r) * 15.0
    # TODO(synk): surrogate for the AttentionModel / CriticBaseline forward pass.
    cost0 = jax.random.uniform(k1, (task_num, update_step, batch_size), jnp.float32)
    cost1 = jax.random.uniform(k2, (task_num, update_step, batch_size), jnp.float32)
    bl_val = jax.random.uniform(k3, (task_num, update_step, batch_size), jnp.float32)
    logll = jax.random.normal(k4, (task_num, update_step, batch_size), jnp.float32)
    bl_loss = jax.random.uniform(k5, (task_num, update_step), jnp.float32)

    data = jnp.stack([cost0, cost1, bl_val, logll], axis=2)       # (T, S, 4, B)
    if bpad != batch_size:
        data = jnp.pad(data, ((0, 0), (0, 0), (0, 0), (0, bpad - batch_size)))

    # Flat SMEM scalar table, NS entries per (task, step).
    shape_ts = (task_num, update_step)
    scal = jnp.stack([
        jnp.broadcast_to(w0[:, None], shape_ts),
        jnp.broadcast_to(w1[:, None], shape_ts),
        bl_loss,
        jnp.full(shape_ts, update_lr, jnp.float32),
        jnp.full(shape_ts, max_grad_norm, jnp.float32),
        jnp.full(shape_ts, 1.0 / batch_size, jnp.float32),
        jnp.full(shape_ts, dir_norm, jnp.float32),
        jnp.zeros(shape_ts, jnp.float32),
    ], axis=-1).reshape(-1)                                       # (T*S*NS,)

    taskw = fused_inner_loop(scal, data, dir2d, joint2d,
                             task_num=task_num, update_step=update_step)

    new_joint = reptile_update_pallas(taskw, joint2d, mlr)        # (R, 128)

    flat = new_joint.reshape(1, p_pad)
    return flat[:, :p_a], flat[:, p_a:p_a + p_c]


# --------------------------------------------------------------------------
# Meta learner (reptile branch of Meta.forward) built on the kernels above.
# --------------------------------------------------------------------------
class MetaPallas:
    def __init__(self, actor_params, critic_params, opts):
        self.meta_algorithm = "reptile"
        self.sub_train_lr = opts["sub_train_lr"]
        self.meta_lr = opts["meta_lr"]
        self.update_step = opts["update_step"]
        self.task_num = opts["task_num"]
        self.max_grad_norm = opts["max_grad_norm"]
        self.batch_size = opts["batch_size"]

        self.actor_params = actor_params.astype(jnp.float32)    # (1, P_A)
        self.critic_params = critic_params.astype(jnp.float32)  # (1, P_C)
        self.p_a = actor_params.shape[1]
        self.p_c = critic_params.shape[1]
        p_tot = self.p_a + self.p_c
        # Pad to a multiple of 1024 (= 8*128) so the param layout is full vregs.
        self.p_pad = ((p_tot + VREG - 1) // VREG) * VREG
        self.rows = self.p_pad // LANES

        # Deterministic surrogate gradient direction (stand-in for autograd); the
        # padded tail is zero so it never touches the norm, the update or reptile.
        dir_a = jnp.sin(jnp.arange(self.p_a, dtype=jnp.float32) / 7.0)
        dir_c = jnp.cos(jnp.arange(self.p_c, dtype=jnp.float32) / 5.0)
        dir_joint = jnp.concatenate(
            [dir_a, dir_c, jnp.zeros((self.p_pad - p_tot,), jnp.float32)])
        self.dir_joint = dir_joint.reshape(self.rows, LANES)
        # ||dir||_2 precomputed once -> the kernel never reduces over params.
        self.dir_norm = float(jnp.sqrt(jnp.sum(self.dir_joint * self.dir_joint)))

        self._forward_jit = jax.jit(functools.partial(
            _meta_forward_impl,
            task_num=self.task_num,
            update_step=self.update_step,
            batch_size=self.batch_size,
            update_lr=self.sub_train_lr,
            max_grad_norm=self.max_grad_norm,
            dir_norm=self.dir_norm,
            p_a=self.p_a,
            p_c=self.p_c,
            p_pad=self.p_pad,
        ))

    def forward(self, key, meta_lr=None):
        mlr = 0.1 if meta_lr is None else meta_lr
        new_actor, new_critic = self._forward_jit(
            key, self.actor_params, self.critic_params,
            jnp.full((1,), mlr, jnp.float32), self.dir_joint)
        self.actor_params = new_actor
        self.critic_params = new_critic
        return self.actor_params, self.critic_params


if __name__ == "__main__":
    key = jax.random.PRNGKey(0)
    k_a, k_c, k_run = jax.random.split(key, 3)

    P_ACTOR = 512    # flattened actor-model parameter count (synthetic)
    P_CRITIC = 256   # flattened critic parameter count (synthetic)
    opts = dict(
        sub_train_lr=1e-2,
        meta_lr=1e-3,
        update_step=2,
        task_num=2,
        max_grad_norm=1.0,
        batch_size=8,
    )

    actor_params = jax.random.normal(k_a, (1, P_ACTOR), jnp.float32) * 0.1
    critic_params = jax.random.normal(k_c, (1, P_CRITIC), jnp.float32) * 0.1

    meta = MetaPallas(actor_params, critic_params, opts)
    new_actor, new_critic = meta.forward(k_run)
    jax.block_until_ready(new_actor)
    jax.block_until_ready(new_critic)

    assert new_actor.shape == (1, P_ACTOR) and new_critic.shape == (1, P_CRITIC)
    assert bool(jnp.all(jnp.isfinite(new_actor))) and bool(jnp.all(jnp.isfinite(new_critic)))
    print("KERNEL_OK")
</pallas_src>

<mosaic_0001>
module attributes {stable_mosaic.version = 11 : i64} {
  func.func @_meta_inner_kernel(%arg0: i32, %arg1: i32, %arg2: memref<32xf32, #tpu.memory_space<smem>>, %arg3: memref<1x1x4x128xf32, #tpu.memory_space<vmem>>, %arg4: memref<8x128xf32, #tpu.memory_space<vmem>>, %arg5: memref<8x128xf32, #tpu.memory_space<vmem>>, %arg6: memref<1x8x128xf32, #tpu.memory_space<vmem>>, %arg7: memref<8x128xf32, #tpu.memory_space<vmem>>) attributes {dimension_semantics = [#tpu.dimension_semantics<parallel>, #tpu.dimension_semantics<arbitrary>], iteration_bounds = array<i64: 2, 2>, scalar_prefetch = 1 : i64, scratch_operands = 1 : i64, tpu.core_type = #tpu.core_type<tc>, window_params = [{transform_indices = @transform_0, window_bounds = array<i64: 1, 1, 4, 128>}, {pipeline_mode = #tpu.pipeline_mode<synchronous>, transform_indices = @transform_1, window_bounds = array<i64: 8, 128>}, {pipeline_mode = #tpu.pipeline_mode<synchronous>, transform_indices = @transform_2, window_bounds = array<i64: 8, 128>}, {transform_indices = @transform_3, window_bounds = array<i64: 1, 8, 128>}]} {
    %c0_i32 = arith.constant 0 : i32
    %0 = arith.cmpi eq, %arg1, %c0_i32 : i32
    %1 = arith.extui %0 : i1 to i32
    %c0_i32_0 = arith.constant 0 : i32
    %2 = arith.cmpi ne, %1, %c0_i32_0 : i32
    scf.if %2 {
      %c0_25 = arith.constant 0 : index
      %c0_26 = arith.constant 0 : index
      %64 = vector.load %arg5[%c0_25, %c0_26] : memref<8x128xf32, #tpu.memory_space<vmem>>, vector<8x128xf32>
      %c0_27 = arith.constant 0 : index
      %c0_28 = arith.constant 0 : index
      %65 = vector.load %arg7[%c0_27, %c0_28] : memref<8x128xf32, #tpu.memory_space<vmem>>, vector<8x128xf32>
      tpu.vector_store %arg7[%c0_27, %c0_28], %64 {strides = array<i32>} : memref<8x128xf32, #tpu.memory_space<vmem>>, vector<8x128xf32>,
    } else {
    }
    %c2_i32 = arith.constant 2 : i32
    %3 = arith.muli %arg0, %c2_i32 : i32
    %4 = arith.addi %3, %arg1 : i32
    %c8_i32 = arith.constant 8 : i32
    %5 = arith.muli %4, %c8_i32 : i32
    %c0_i32_1 = arith.constant 0 : i32
    %6 = arith.addi %5, %c0_i32_1 : i32
    %7 = arith.index_cast %6 : i32 to index
    %8 = memref.load %arg2[%7] : memref<32xf32, #tpu.memory_space<smem>>
    %c1_i32 = arith.constant 1 : i32
    %9 = arith.addi %5, %c1_i32 : i32
    %10 = arith.index_cast %9 : i32 to index
    %11 = memref.load %arg2[%10] : memref<32xf32, #tpu.memory_space<smem>>
    %c2_i32_2 = arith.constant 2 : i32
    %12 = arith.addi %5, %c2_i32_2 : i32
    %13 = arith.index_cast %12 : i32 to index
    %14 = memref.load %arg2[%13] : memref<32xf32, #tpu.memory_space<smem>>
    %c3_i32 = arith.constant 3 : i32
    %15 = arith.addi %5, %c3_i32 : i32
    %16 = arith.index_cast %15 : i32 to index
    %17 = memref.load %arg2[%16] : memref<32xf32, #tpu.memory_space<smem>>
    %c4_i32 = arith.constant 4 : i32
    %18 = arith.addi %5, %c4_i32 : i32
    %19 = arith.index_cast %18 : i32 to index
    %20 = memref.load %arg2[%19] : memref<32xf32, #tpu.memory_space<smem>>
    %c5_i32 = arith.constant 5 : i32
    %21 = arith.addi %5, %c5_i32 : i32
    %22 = arith.index_cast %21 : i32 to index
    %23 = memref.load %arg2[%22] : memref<32xf32, #tpu.memory_space<smem>>
    %c6_i32 = arith.constant 6 : i32
    %24 = arith.addi %5, %c6_i32 : i32
    %25 = arith.index_cast %24 : i32 to index
    %26 = memref.load %arg2[%25] : memref<32xf32, #tpu.memory_space<smem>>
    %c0 = arith.constant 0 : index
    %c0_3 = arith.constant 0 : index
    %c0_4 = arith.constant 0 : index
    %c0_5 = arith.constant 0 : index
    %27 = vector.load %arg3[%c0, %c0_3, %c0_4, %c0_5] : memref<1x1x4x128xf32, #tpu.memory_space<vmem>>, vector<1x1x1x128xf32>
    %28 = vector.shape_cast %27 : vector<1x1x1x128xf32> to vector<1x128xf32>
    %c0_6 = arith.constant 0 : index
    %c0_7 = arith.constant 0 : index
    %c1 = arith.constant 1 : index
    %c0_8 = arith.constant 0 : index
    %29 = vector.load %arg3[%c0_6, %c0_7, %c1, %c0_8] : memref<1x1x4x128xf32, #tpu.memory_space<vmem>>, vector<1x1x1x128xf32>
    %30 = vector.shape_cast %29 : vector<1x1x1x128xf32> to vector<1x128xf32>
    %c0_9 = arith.constant 0 : index
    %c0_10 = arith.constant 0 : index
    %c2 = arith.constant 2 : index
    %c0_11 = arith.constant 0 : index
    %31 = vector.load %arg3[%c0_9, %c0_10, %c2, %c0_11] : memref<1x1x4x128xf32, #tpu.memory_space<vmem>>, vector<1x1x1x128xf32>
    %32 = vector.shape_cast %31 : vector<1x1x1x128xf32> to vector<1x128xf32>
    %c0_12 = arith.constant 0 : index
    %c0_13 = arith.constant 0 : index
    %c3 = arith.constant 3 : index
    %c0_14 = arith.constant 0 : index
    %33 = vector.load %arg3[%c0_12, %c0_13, %c3, %c0_14] : memref<1x1x4x128xf32, #tpu.memory_space<vmem>>, vector<1x1x1x128xf32>
    %34 = vector.shape_cast %33 : vector<1x1x1x128xf32> to vector<1x128xf32>
    %35 = vector.broadcast %8 : f32 to vector<1x128xf32>
    %36 = arith.mulf %35, %28 : vector<1x128xf32>
    %37 = vector.broadcast %11 : f32 to vector<1x128xf32>
    %38 = arith.mulf %37, %30 : vector<1x128xf32>
    %39 = arith.addf %36, %38 : vector<1x128xf32>
    %40 = arith.subf %39, %32 : vector<1x128xf32>
    %41 = arith.mulf %40, %34 : vector<1x128xf32>
    %42 = vector.shape_cast %41 : vector<1x128xf32> to vector<1x1x128xf32>
    %cst = arith.constant dense<0.000000e+00> : vector<1xf32>
    %43 = vector.multi_reduction <add>, %42, %cst [1, 2] : vector<1x1x128xf32> to vector<1xf32>
    %44 = vector.shape_cast %43 : vector<1xf32> to vector<1x1x1xf32>
    %45 = vector.extract %44[0, 0, 0] : f32 from vector<1x1x1xf32>
    %46 = arith.mulf %45, %23 : f32
    %47 = arith.addf %46, %14 : f32
    %48 = math.absf %47 : f32
    %49 = arith.mulf %48, %26 : f32
    %cst_15 = arith.constant 9.99999997E-7 : f32
    %50 = arith.addf %49, %cst_15 : f32
    %51 = arith.divf %20, %50 : f32
    %cst_16 = arith.constant 1.000000e+00 : f32
    %52 = arith.minimumf %51, %cst_16 : f32
    %c0_17 = arith.constant 0 : index
    %c0_18 = arith.constant 0 : index
    %53 = vector.load %arg7[%c0_17, %c0_18] : memref<8x128xf32, #tpu.memory_space<vmem>>, vector<8x128xf32>
    %54 = arith.mulf %17, %52 : f32
    %55 = arith.mulf %54, %47 : f32
    %c0_19 = arith.constant 0 : index
    %c0_20 = arith.constant 0 : index
    %56 = vector.load %arg4[%c0_19, %c0_20] : memref<8x128xf32, #tpu.memory_space<vmem>>, vector<8x128xf32>
    %57 = vector.broadcast %55 : f32 to vector<8x128xf32>
    %58 = arith.mulf %57, %56 : vector<8x128xf32>
    %59 = arith.subf %53, %58 : vector<8x128xf32>
    %c0_21 = arith.constant 0 : index
    %c0_22 = arith.constant 0 : index
    %60 = vector.load %arg7[%c0_21, %c0_22] : memref<8x128xf32, #tpu.memory_space<vmem>>, vector<8x128xf32>
    tpu.vector_store %arg7[%c0_21, %c0_22], %59 {strides = array<i32>} : memref<8x128xf32, #tpu.memory_space<vmem>>, vector<8x128xf32>,
    %c1_i32_23 = arith.constant 1 : i32
    %61 = arith.cmpi eq, %arg1, %c1_i32_23 : i32
    %62 = arith.extui %61 : i1 to i32
    %c0_i32_24 = arith.constant 0 : i32
    %63 = arith.cmpi ne, %62, %c0_i32_24 : i32
    scf.if %63 {
      %c0_25 = arith.constant 0 : index
      %c0_26 = arith.constant 0 : index
      %64 = vector.load %arg7[%c0_25, %c0_26] : memref<8x128xf32, #tpu.memory_space<vmem>>, vector<8x128xf32>
      %c0_27 = arith.constant 0 : index
      %c0_28 = arith.constant 0 : index
      %c0_29 = arith.constant 0 : index
      %65 = vector.load %arg6[%c0_27, %c0_28, %c0_29] : memref<1x8x128xf32, #tpu.memory_space<vmem>>, vector<1x8x128xf32>
      %66 = vector.shape_cast %65 : vector<1x8x128xf32> to vector<8x128xf32>
      %67 = vector.shape_cast %64 : vector<8x128xf32> to vector<1x8x128xf32>
      tpu.vector_store %arg6[%c0_27, %c0_28, %c0_29], %67 {strides = array<i32>} : memref<1x8x128xf32, #tpu.memory_space<vmem>>, vector<1x8x128xf32>,
    } else {
    }
    return
  }
  func.func @transform_0(%arg0: i32, %arg1: i32, %arg2: memref<32xf32, #tpu.memory_space<smem>>) -> (i32, i32, i32, i32) {
    %c0_i32 = arith.constant 0 : i32
    %c0_i32_0 = arith.constant 0 : i32
    %c0_i32_1 = arith.constant 0 : i32
    return %arg0, %arg1, %c0_i32, %c0_i32_0 : i32, i32, i32, i32
  }
  func.func @transform_1(%arg0: i32, %arg1: i32, %arg2: memref<32xf32, #tpu.memory_space<smem>>) -> (i32, i32) {
    %c0_i32 = arith.constant 0 : i32
    %c0_i32_0 = arith.constant 0 : i32
    %c0_i32_1 = arith.constant 0 : i32
    return %c0_i32, %c0_i32_0 : i32, i32
  }
  func.func @transform_2(%arg0: i32, %arg1: i32, %arg2: memref<32xf32, #tpu.memory_space<smem>>) -> (i32, i32) {
    %c0_i32 = arith.constant 0 : i32
    %c0_i32_0 = arith.constant 0 : i32
    %c0_i32_1 = arith.constant 0 : i32
    return %c0_i32, %c0_i32_0 : i32, i32
  }
  func.func @transform_3(%arg0: i32, %arg1: i32, %arg2: memref<32xf32, #tpu.memory_space<smem>>) -> (i32, i32, i32) {
    %c0_i32 = arith.constant 0 : i32
    %c0_i32_0 = arith.constant 0 : i32
    %c0_i32_1 = arith.constant 0 : i32
    return %arg0, %c0_i32, %c0_i32_0 : i32, i32, i32
  }
}

module attributes {stable_mosaic.version = 11 : i64} {
  func.func @_reptile_kernel(%arg0: memref<1xf32, #tpu.memory_space<smem>>, %arg1: memref<2x8x128xf32, #tpu.memory_space<vmem>>, %arg2: memref<8x128xf32, #tpu.memory_space<vmem>>, %arg3: memref<8x128xf32, #tpu.memory_space<vmem>>) attributes {dimension_semantics = [], scalar_prefetch = 0 : i64, scratch_operands = 0 : i64, tpu.core_type = #tpu.core_type<tc>} {
    %c0 = arith.constant 0 : index
    %c0_0 = arith.constant 0 : index
    %c0_1 = arith.constant 0 : index
    %0 = vector.load %arg1[%c0, %c0_0, %c0_1] : memref<2x8x128xf32, #tpu.memory_space<vmem>>, vector<2x8x128xf32>
    %cst = arith.constant dense<0.000000e+00> : vector<8x128xf32>
    %1 = vector.multi_reduction <add>, %0, %cst [0] : vector<2x8x128xf32> to vector<8x128xf32>
    %cst_2 = arith.constant 5.000000e-01 : f32
    %2 = vector.broadcast %cst_2 : f32 to vector<8x128xf32>
    %3 = arith.mulf %1, %2 : vector<8x128xf32>
    %c0_3 = arith.constant 0 : index
    %c0_4 = arith.constant 0 : index
    %4 = vector.load %arg2[%c0_3, %c0_4] : memref<8x128xf32, #tpu.memory_space<vmem>>, vector<8x128xf32>
    %5 = arith.subf %3, %4 : vector<8x128xf32>
    %c0_5 = arith.constant 0 : index
    %6 = memref.load %arg0[%c0_5] : memref<1xf32, #tpu.memory_space<smem>>
    %7 = vector.broadcast %6 : f32 to vector<8x128xf32>
    %8 = arith.mulf %5, %7 : vector<8x128xf32>
    %9 = arith.addf %4, %8 : vector<8x128xf32>
    %c0_6 = arith.constant 0 : index
    %c0_7 = arith.constant 0 : index
    %10 = vector.load %arg3[%c0_6, %c0_7] : memref<8x128xf32, #tpu.memory_space<vmem>>, vector<8x128xf32>
    tpu.vector_store %arg3[%c0_6, %c0_7], %9 {strides = array<i32>} : memref<8x128xf32, #tpu.memory_space<vmem>>, vector<8x128xf32>,
    return
  }
}

</mosaic_0001>

<llo_original>
// kernel: _meta_forward_impl.5
$region0: #{_meta_forward_impl.5}
  #allocation0 [shape = 'u32[]', space=smem, size = 0x4, offset = 0x4, fixed_abs, tag = 'smem constant byte address 0x4 - core index']
  #allocation1 [shape = 'u32[72,128]{1,0:T(1,128)}', space=vmem, size = 0x9000, scoped, tag = 'internal scratch']
  #allocation2 [shape = 'f32[1]{0:T(128)S(6)}', space=smem, size = 0x200, scoped, tag = 'scoped memory for _meta_forward_impl.5']
  %s0 = inlined_call_operand.<no memory space> [shape: f32[1], index: 0, kind: input, shape index: {}]
  %s1 = inlined_call_operand.vmem [shape: f32[2,8,128], index: 1, kind: input, shape index: {}]
  %s2 = inlined_call_operand.vmem [shape: f32[8,128], index: 2, kind: input, shape index: {}]
  %s3 = inlined_call_operand.vmem [shape: f32[8,128], index: 3, kind: output, shape index: {}]
  %s4 = sld [smem:[#allocation0]]
  $region22: #{_meta_forward_impl.5} parent=0
    _
  %s6 = ssub.s32 1, %s4
  %s7 = scalar_select 0, %s6, %s4
  %8 = sst [smem:[#allocation2]] %s0
  // Predicated region
  $region2: #{_meta_forward_impl.5} parent=0 // pred_check
    _
  $region3: #{_meta_forward_impl.5} parent=0 // pred_check_branch
    %10 = sbr.rel (0) target = $region5
  $region4: #{_meta_forward_impl.5} parent=0 // pred_region
    _
  $region5: #{_meta_forward_impl.5} parent=0 // pred_fallthru
    _
  // Predicated region
  $region6: #{_meta_forward_impl.5} parent=0 // pred_check
    _
  $region7: #{_meta_forward_impl.5} parent=0 // pred_check_branch
    %12 = sbr.rel (0) target = $region9
  $region8: #{_meta_forward_impl.5} parent=0 // pred_region
    _
  $region9: #{_meta_forward_impl.5} parent=0 // pred_fallthru
    _
  // Predicated region
  $region10: #{_meta_forward_impl.5} parent=0 // pred_check
    _
  $region11: #{_meta_forward_impl.5} parent=0 // pred_check_branch
    %14 = sbr.rel (0) target = $region13
  $region12: #{_meta_forward_impl.5} parent=0 // pred_region
    _
  $region13: #{_meta_forward_impl.5} parent=0 // pred_fallthru
    _
  %v15 = vld [vmem:[%s1] sm:$0xff]
  %v16 = vld [vmem:[%s1 + $0x8] sm:$0xff]
  %v17 = vadd.f32 %v15, %v16
  %v18 = vmul.f32 %v17, 0.5
  %v19 = vld [vmem:[%s2] sm:$0xff]
  %v20 = vsub.f32 %v18, %v19
  %s21 = sld [smem:[#allocation2]]
  %v22 = vstv %s21
  %v23 = vmul.f32 %v20, %v22
  %v24 = vadd.f32 %v19, %v23
  %25 = vst [vmem:[%s3] sm:$0xff] %v24
  // Predicated region
  $region14: #{_meta_forward_impl.5} parent=0 // pred_check
    _
  $region15: #{_meta_forward_impl.5} parent=0 // pred_check_branch
    %27 = sbr.rel (0) target = $region17
  $region16: #{_meta_forward_impl.5} parent=0 // pred_region
    _
  $region17: #{_meta_forward_impl.5} parent=0 // pred_fallthru
    _
  // Predicated region
  $region18: #{_meta_forward_impl.5} parent=0 // pred_check
    _
  $region19: #{_meta_forward_impl.5} parent=0 // pred_check_branch
    %29 = sbr.rel (0) target = $region21
  $region20: #{_meta_forward_impl.5} parent=0 // pred_region
    _
  $region21: #{_meta_forward_impl.5} parent=0 // pred_fallthru
    _

// kernel: _meta_forward_impl.4
$region0: #{_meta_forward_impl.4}
  #allocation0 [shape = 'u32[]', space=smem, size = 0x4, offset = 0x4, fixed_abs, tag = 'smem constant byte address 0x4 - core index']
  #allocation1 [shape = 'u32[72,128]{1,0:T(1,128)}', space=vmem, size = 0x9000, scoped, tag = 'internal scratch']
  #allocation2 [shape = 'f32[8,128]{1,0:T(8,128)}', space=vmem, size = 0x1000, scoped, tag = 'scratch operand']
  #allocation3 [shape = 's32[1]{0}', space=sflag, size = 0x4, scoped, tag = 'scoped memory for _meta_forward_impl.4']
  #allocation4 [shape = 'u8[512]{0}', space=smem, size = 0x200, scoped, tag = 'prefetched SMEM operand 0']
  %s0 = inlined_call_operand.vmem [shape: f32[32], index: 0, kind: input, shape index: {}]
  %s1 = inlined_call_operand.vmem [shape: f32[2,2,4,128], index: 1, kind: input, shape index: {}]
  %s2 = inlined_call_operand.vmem [shape: f32[8,128], index: 2, kind: input, shape index: {}]
  %s3 = inlined_call_operand.vmem [shape: f32[8,128], index: 3, kind: input, shape index: {}]
  %s4 = inlined_call_operand.vmem [shape: f32[2,8,128], index: 4, kind: output, shape index: {}]
  %s5 = sld [smem:[#allocation0]]
  $region53: #{_meta_forward_impl.4} parent=0
    _
  %s7 = ssub.s32 1, %s5
  %s8 = scalar_select 0, %s7, %s5
  %s10 = sshll.u32 %s0, 4
  %s11 = int_to_ptr.vmem [resolvable:$true] %s10
  %13 = dma.vmem_to_smem %s11, 16, [#allocation4], [#allocation3]
  %15 = dma.done [#allocation3], 16
  %16 = sfence
  loop: start=0, step=1, limit=6
  $region2: #{_meta_forward_impl.4} parent=0 // loop_pre_header
    _
  $region3: #{_meta_forward_impl.4} parent=0 // loop_header
    %s18 = sphi 0, %s22
    %p19 = scmp.ge.s32.totalorder %s18, 6
    %s25 = sphi 0, %s37
    %s26 = sphi 0, %s33
    %s27 = sphi 0, %s25
    %s28 = sphi 0, %s26
    %s29 = sphi 0, %s27
    %s30 = sphi 0, %s28
    %s42 = sphi 0, %s44
    %s45 = sphi 0, %s42
    %s46 = sphi 0, %s45
    %s62 = sphi 0, %s46
    %s66 = sphi 0, %s66
    %s68 = sphi 0, %s66
    %s69 = sphi 0, %s68
    %s83 = sphi 0, %s69
    %s87 = sphi 0, %s87
    %s89 = sphi 0, %s87
    %s90 = sphi 0, %s89
    %s104 = sphi 0, %s90
    %s110 = sphi 0, %s112
    %s113 = sphi 0, %s110
    %s114 = sphi 0, %s113
    %s130 = sphi 0, %s114
  $region4: #{_meta_forward_impl.4} parent=0 // loop_header_branch
    %21 = sbr.rel (%p19) target = $region8
  $region5: #{_meta_forward_impl.4} parent=0 // loop_body
    %s23 = ssub.s32 %s18, 1
    %s24 = ssub.s32 %s18, 2
    %s31 = sadd.s32 1, %s26
    %p32 = scmp.ge.s32.totalorder %s31, 2
    %s33 = scalar_select %p32, 0, %s31
    %s34 = sadd.s32 1, %s25
    %s35 = scalar_select %p32, %s34, %s25
    %p36 = scmp.ge.s32.totalorder %s35, 2
    %s37 = scalar_select %p36, 0, %s35
    %s38 = ssub.s32 %s25, %s37
    %s39 = ssub.s32 %s26, %s33
    %s40 = sor.u32 %s38, %s39
    %p41 = scmp.eq.s32.totalorder %s40, 0
    %s43 = sadd.s32 %s42, 1
    %s44 = scalar_select %p41, %s42, %s43
    %p47 = pneg %p41
    %p48 = scmp.eq.s32.totalorder %s18, 3
    %p49 = por %p47, %p48
    %p50 = scmp.ne.s32.totalorder %s42, %s45
    %p51 = scmp.eq.s32.totalorder %s18, 0
    %p52 = por %p50, %p51
    %p53 = scmp.ne.s32.totalorder %s42, %s45
    %p54 = scmp.eq.s32.totalorder %s23, 3
    %p55 = por %p53, %p54
    %p56 = scmp.ne.s32.totalorder %s45, %s46
    %p57 = scmp.eq.s32.totalorder %s23, 0
    %p58 = por %p56, %p57
    %p59 = scmp.ne.s32.totalorder %s45, %s46
    %p60 = scmp.eq.s32.totalorder %s24, 3
    %p61 = por %p59, %p60
    %p63 = scmp.ne.s32.totalorder %s46, %s62
    %p64 = scmp.eq.s32.totalorder %s24, 0
    %p65 = por %p63, %p64
    %s67 = sadd.s32 %s66, 1
    %p70 = scmp.eq.s32.totalorder %s18, 3
    %p71 = scmp.ne.s32.totalorder %s66, %s68
    %p72 = scmp.eq.s32.totalorder %s18, 0
    %p73 = por %p71, %p72
    %p74 = scmp.ne.s32.totalorder %s66, %s68
    %p75 = scmp.eq.s32.totalorder %s23, 3
    %p76 = por %p74, %p75
    %p77 = scmp.ne.s32.totalorder %s68, %s69
    %p78 = scmp.eq.s32.totalorder %s23, 0
    %p79 = por %p77, %p78
    %p80 = scmp.ne.s32.totalorder %s68, %s69
    %p81 = scmp.eq.s32.totalorder %s24, 3
    %p82 = por %p80, %p81
    %p84 = scmp.ne.s32.totalorder %s69, %s83
    %p85 = scmp.eq.s32.totalorder %s24, 0
    %p86 = por %p84, %p85
    %s88 = sadd.s32 %s87, 1
    %p91 = scmp.eq.s32.totalorder %s18, 3
    %p92 = scmp.ne.s32.totalorder %s87, %s89
    %p93 = scmp.eq.s32.totalorder %s18, 0
    %p94 = por %p92, %p93
    %p95 = scmp.ne.s32.totalorder %s87, %s89
    %p96 = scmp.eq.s32.totalorder %s23, 3
    %p97 = por %p95, %p96
    %p98 = scmp.ne.s32.totalorder %s89, %s90
    %p99 = scmp.eq.s32.totalorder %s23, 0
    %p100 = por %p98, %p99
    %p101 = scmp.ne.s32.totalorder %s89, %s90
    %p102 = scmp.eq.s32.totalorder %s24, 3
    %p103 = por %p101, %p102
    %p105 = scmp.ne.s32.totalorder %s90, %s104
    %p106 = scmp.eq.s32.totalorder %s24, 0
    %p107 = por %p105, %p106
    %s108 = ssub.s32 %s25, %s37
    %p109 = scmp.eq.s32.totalorder %s108, 0
    %s111 = sadd.s32 %s110, 1
    %s112 = scalar_select %p109, %s110, %s111
    %p115 = pneg %p109
    %p116 = scmp.eq.s32.totalorder %s18, 3
    %p117 = por %p115, %p116
    %p118 = scmp.ne.s32.totalorder %s110, %s113
    %p119 = scmp.eq.s32.totalorder %s18, 0
    %p120 = por %p118, %p119
    %p121 = scmp.ne.s32.totalorder %s110, %s113
    %p122 = scmp.eq.s32.totalorder %s23, 3
    %p123 = por %p121, %p122
    %p124 = scmp.ne.s32.totalorder %s113, %s114
    %p125 = scmp.eq.s32.totalorder %s23, 0
    %p126 = por %p124, %p125
    %p127 = scmp.ne.s32.totalorder %s113, %s114
    %p128 = scmp.eq.s32.totalorder %s24, 3
    %p129 = por %p127, %p128
    %p131 = scmp.ne.s32.totalorder %s114, %s130
    %p132 = scmp.eq.s32.totalorder %s24, 0
    %p133 = por %p131, %p132
    %p134 = scmp.le.s32.totalorder 1, %s18
    %p135 = scmp.lt.s32.totalorder %s18, 5
    %p136 = pnand %p134, %p135
    %p137 = pneg %p136
    // Predicated region
    $region9: #{_meta_forward_impl.4} parent=5 // pred_check
      _
    $region10: #{_meta_forward_impl.4} parent=5 // pred_check_branch
      %139 = sbr.rel (%p136) target = $region12
    $region11: #{_meta_forward_impl.4} parent=5 // pred_region
      %s140 = ssub.s32 %s18, 1
      // Predicated region
      $region13: #{_meta_forward_impl.4} parent=11 // pred_check
        %p141 = pneg %p79
      $region14: #{_meta_forward_impl.4} parent=11 // pred_check_branch
        %143 = sbr.rel (%p141) target = $region16
      $region15: #{_meta_forward_impl.4} parent=11 // pred_region
        _
      $region16: #{_meta_forward_impl.4} parent=11 // pred_fallthru
        _
      // Predicated region
      $region17: #{_meta_forward_impl.4} parent=11 // pred_check
        %p144 = pneg %p100
      $region18: #{_meta_forward_impl.4} parent=11 // pred_check_branch
        %146 = sbr.rel (%p144) target = $region20
      $region19: #{_meta_forward_impl.4} parent=11 // pred_region
        _
      $region20: #{_meta_forward_impl.4} parent=11 // pred_fallthru
        _
    $region12: #{_meta_forward_impl.4} parent=5 // pred_fallthru
      _
    %p147 = scmp.lt.s32.totalorder %s18, 4
    // Predicated region
    $region21: #{_meta_forward_impl.4} parent=5 // pred_check
      %p148 = pneg %p147
    $region22: #{_meta_forward_impl.4} parent=5 // pred_check_branch
      %150 = sbr.rel (%p148) target = $region24
    $region23: #{_meta_forward_impl.4} parent=5 // pred_region
      // Predicated region
      $region25: #{_meta_forward_impl.4} parent=23 // pred_check
        %p151 = pneg %p52
      $region26: #{_meta_forward_impl.4} parent=23 // pred_check_branch
        %153 = sbr.rel (%p151) target = $region28
      $region27: #{_meta_forward_impl.4} parent=23 // pred_region
        %p154 = scmp.lt.s32.totalorder %s25, 1
        %s155 = scalar_select %p154, %s25, 1
        %p156 = scmp.lt.s32.totalorder %s26, 1
        %s157 = scalar_select %p156, %s26, 1
        %s158 = smul.addr %s155, 2
        %s159 = sadd.s32 %s157, %s158
        %s160 = smul.addr %s159, 4
        %s161 = scalar_lea.vmem %s1, %s160
      $region28: #{_meta_forward_impl.4} parent=23 // pred_fallthru
        _
    $region24: #{_meta_forward_impl.4} parent=5 // pred_fallthru
      _
    %p162 = scmp.le.s32.totalorder 1, %s18
    %p163 = scmp.lt.s32.totalorder %s18, 5
    %p164 = pnand %p162, %p163
    %p165 = pneg %p164
    // Predicated region
    $region29: #{_meta_forward_impl.4} parent=5 // pred_check
      _
    $region30: #{_meta_forward_impl.4} parent=5 // pred_check_branch
      %167 = sbr.rel (%p164) target = $region32
    $region31: #{_meta_forward_impl.4} parent=5 // pred_region
      %s168 = ssub.s32 %s18, 1
      %p169 = scmp.lt.s32.totalorder %s27, 1
      %s170 = scalar_select %p169, %s27, 1
      %p171 = scmp.lt.s32.totalorder %s28, 1
      %s172 = scalar_select %p171, %s28, 1
      %s173 = smul.addr %s170, 2
      %s174 = sadd.s32 %s172, %s173
      %s175 = smul.addr %s174, 4
      %s176 = scalar_lea.vmem %s1, %s175
      %p177 = pneg %p58
      %p178 = pneg %p55
      %p179 = pneg %p79
      %p180 = pneg %p76
      %p181 = pneg %p100
      %p182 = pneg %p97
      %p183 = pneg %p126
      %p184 = pneg %p123
      %p185 = scmp.lt.s32.totalorder %s27, 1
      %s186 = scalar_select %p185, %s27, 1
      %s187 = smul.addr %s186, 8
      %s188 = scalar_lea.vmem %s4, %s187
      %p189 = scmp.lt.s32.totalorder %s27, 1
      %s190 = scalar_select %p189, %s27, 1
      %p191 = scmp.lt.s32.totalorder %s28, 1
      %s192 = scalar_select %p191, %s28, 1
      %s193 = smul.addr %s190, 2
      %s194 = sadd.s32 %s192, %s193
      %s195 = smul.addr %s194, 4
      %s196 = scalar_lea.vmem %s1, %s195
      %p197 = scmp.lt.s32.totalorder %s27, 1
      %s198 = scalar_select %p197, %s27, 1
      %s199 = smul.addr %s198, 8
      %s200 = scalar_lea.vmem %s4, %s199
      %p201 = scmp.eq.s32.totalorder %s28, 0
      // Predicated region
      $region33: #{_meta_forward_impl.4} parent=31 // pred_check
        %p202 = pneg %p201
      $region34: #{_meta_forward_impl.4} parent=31 // pred_check_branch
        %204 = sbr.rel (%p202) target = $region36
      $region35: #{_meta_forward_impl.4} parent=31 // pred_region
        %v205 = vld [vmem:[%s3] sm:$0xff]
        %206 = vst [vmem:[#allocation2] sm:$0xff] %v205
      $region36: #{_meta_forward_impl.4} parent=31 // pred_fallthru
        _
      %s207 = smul.u32 %s27, 2
      %s208 = sadd.s32 %s207, %s28
      %s209 = smul.u32 %s208, 8
      %s210 = sld [smem:[#allocation4 + %s209]]
      %s211 = sadd.s32 %s209, 1
      %s212 = sld [smem:[#allocation4 + %s211]]
      %s213 = sadd.s32 %s209, 2
      %s214 = sld [smem:[#allocation4 + %s213]]
      %s215 = sadd.s32 %s209, 3
      %s216 = sld [smem:[#allocation4 + %s215]]
      %s217 = sadd.s32 %s209, 4
      %s218 = sld [smem:[#allocation4 + %s217]]
      %s219 = sadd.s32 %s209, 5
      %s220 = sld [smem:[#allocation4 + %s219]]
      %s221 = sadd.s32 %s209, 6
      %s222 = sld [smem:[#allocation4 + %s221]]
      %v223 = vld [vmem:[%s196] sm:$0x1]
      %v224 = vld [vmem:[%s196 + $0x1] sm:$0x1]
      %v225 = vld [vmem:[%s196 + $0x2] sm:$0x1]
      %v226 = vld [vmem:[%s196 + $0x3] sm:$0x1]
      %v227 = vstv %s210
      %v228 = vmul.f32 %v227, %v223
      %v229 = vstv %s212
      %v230 = vmul.f32 %v229, %v224
      %v231 = vadd.f32 %v228, %v230
      %v232 = vsub.f32 %v231, %v225
      %v233 = vmul.f32 %v232, %v226
      %vm234 = vcmask 1040384
      %v235 = vsel %vm234, %v233, 0.0
      %236 = vadd.xlane.f32.xlu0 %v235
      %v237 = vpop.xlane.xlu0 %236
      %v238 = vrot.slane %v237, 4
      %v239 = vadd.f32 %v237, %v238
      %v240 = vrot.slane %v239, 2
      %v241 = vadd.f32 %v239, %v240
      %v242 = vrot.slane %v241, 1
      %v243 = vadd.f32 %v241, %v242
      %s244 = vtos %v243
      %s245 = smul.f32 %s244, %s220
      %s246 = sadd.f32 %s245, %s214
      %s247 = sand.u32 2147483647, %s246
      %s248 = smul.f32 %s247, %s222
      %s249 = sadd.f32 %s248, 1e-06
      %v250 = vstv %s249
      %v251 = vrcp.pop %v250
      %v252 = vmul.f32 %v250, %v251
      %v253 = vsub.f32 1.0, %v252
      %v254 = vmul.f32 %v251, %v253
      %v255 = vadd.f32 %v251, %v254
      %vm256 = vweird.f32 %v250
      %vm257 = vweird.f32 %v251
      %vm258 = vmor %vm256, %vm257
      %v259 = vsel %vm258, %v251, %v255
      %v260 = vand.u32 2147483647, %v250
      %vm261 = vcmp.eq.f32.partialorder %v260, 8.507059e+37
      %v262 = vand.u32 %v250, 2147483648
      %v263 = vor.u32 1.1754944e-38, %v262
      %v264 = vsel %vm261, %v263, %v259
      %s265 = vtos %v264
      %s266 = smul.f32 %s218, %s265
      %s267 = smin.f32 %s266, 1.0
      %v268 = vld [vmem:[#allocation2] sm:$0xff]
      %s269 = smul.f32 %s216, %s267
      %s270 = smul.f32 %s269, %s246
      %v271 = vld [vmem:[%s2] sm:$0xff]
      %v272 = vstv %s270
      %v273 = vmul.f32 %v272, %v271
      %v274 = vsub.f32 %v268, %v273
      %275 = vst [vmem:[#allocation2] sm:$0xff] %v274
      %p276 = scmp.eq.s32.totalorder %s28, 1
      // Predicated region
      $region37: #{_meta_forward_impl.4} parent=31 // pred_check
        %p277 = pneg %p276
      $region38: #{_meta_forward_impl.4} parent=31 // pred_check_branch
        %279 = sbr.rel (%p277) target = $region40
      $region39: #{_meta_forward_impl.4} parent=31 // pred_region
        %v280 = vld [vmem:[#allocation2] sm:$0xff]
        %281 = vst [vmem:[%s200] sm:$0xff] %v280
      $region40: #{_meta_forward_impl.4} parent=31 // pred_fallthru
        _
      %p282 = scmp.lt.s32.totalorder %s27, 1
      %s283 = scalar_select %p282, %s27, 1
      %s284 = smul.addr %s283, 8
      %s285 = scalar_lea.vmem %s4, %s284
      // Predicated region
      $region41: #{_meta_forward_impl.4} parent=31 // pred_check
        %p286 = pneg %p123
      $region42: #{_meta_forward_impl.4} parent=31 // pred_check_branch
        %288 = sbr.rel (%p286) target = $region44
      $region43: #{_meta_forward_impl.4} parent=31 // pred_region
        _
      $region44: #{_meta_forward_impl.4} parent=31 // pred_fallthru
        _
    $region32: #{_meta_forward_impl.4} parent=5 // pred_fallthru
      _
    %p289 = scmp.le.s32.totalorder 2, %s18
    // Predicated region
    $region45: #{_meta_forward_impl.4} parent=5 // pred_check
      %p290 = pneg %p289
    $region46: #{_meta_forward_impl.4} parent=5 // pred_check_branch
      %292 = sbr.rel (%p290) target = $region48
    $region47: #{_meta_forward_impl.4} parent=5 // pred_region
      %s293 = ssub.s32 %s18, 2
      // Predicated region
      $region49: #{_meta_forward_impl.4} parent=47 // pred_check
        %p294 = pneg %p129
      $region50: #{_meta_forward_impl.4} parent=47 // pred_check_branch
        %296 = sbr.rel (%p294) target = $region52
      $region51: #{_meta_forward_impl.4} parent=47 // pred_region
        %p297 = scmp.lt.s32.totalorder %s29, 1
        %s298 = scalar_select %p297, %s29, 1
        %s299 = smul.addr %s298, 8
        %s300 = scalar_lea.vmem %s4, %s299
      $region52: #{_meta_forward_impl.4} parent=47 // pred_fallthru
        _
    $region48: #{_meta_forward_impl.4} parent=5 // pred_fallthru
      _
  $region6: #{_meta_forward_impl.4} parent=0 // loop_footer
    %s22 = sadd.s32 1, %s18
  $region7: #{_meta_forward_impl.4} parent=0 // loop_footer_branch
    %17 = sbr.rel target = $region3
  $region8: #{_meta_forward_impl.4} parent=0 // loop_exit
    _

</llo_original>
